<compile_context>
chip_gen: v5e
topology: v5e:2x2
jax: 0.10.0
libtpu: 0.0.40
codegen_flags: <defaults>
</compile_context>

<pallas_src>
import math

import jax
import jax.numpy as jnp
from jax.experimental import pallas as pl
from jax.experimental.pallas import tpu as pltpu


def _mask_scale_kernel(x_ref, w_ref, o_ref):
    # x_ref: (TM, L) image rows (lane-dense, L % 128 == 0)
    # w_ref: (1,  L) pre-masked weight row, broadcast over the sublane axis
    # o_ref: (TM, L)
    o_ref[...] = (x_ref[...] * w_ref[...]).astype(o_ref.dtype)


def _scale_rows(x2d, w_row, *, tm, grid, L, dtype):
    return pl.pallas_call(
        _mask_scale_kernel,
        out_shape=jax.ShapeDtypeStruct((grid * tm, L), dtype),
        grid_spec=pltpu.PrefetchScalarGridSpec(
            num_scalar_prefetch=0,
            grid=(grid,),
            in_specs=[
                pl.BlockSpec((tm, L), lambda i: (i, 0)),  # image tile
                pl.BlockSpec((1, L), lambda i: (0, 0)),   # weight (resident)
            ],
            out_specs=pl.BlockSpec((tm, L), lambda i: (i, 0)),
        ),
        compiler_params=pltpu.CompilerParams(
            dimension_semantics=("parallel",),
            vmem_limit_bytes=64 * 1024 * 1024,
        ),
    )(x2d, w_row)


def mask_forward(image, weight, pruned, *, target_tile_bytes=2 << 20):
    """image: (B, C, H, W); weight: (W,); pruned: (W,) bool."""
    B, C, H, W = image.shape
    dtype = image.dtype
    itemsize = jnp.dtype(dtype).itemsize

    # Fold pruning into the weight once (weight * mask), computed on host side
    # of the kernel boundary -- O(W) work, keeps the kernel a pure multiply.
    masked_w = jnp.where(pruned, jnp.zeros_like(weight), weight).astype(dtype)

    total = B * C * H * W
    L_flat = (W * 128) // math.gcd(W, 128)  # lcm(W, 128)

    # Pick layout: flat (zero lane padding) unless the minimum (8, L_flat)
    # tile, double-buffered for in+out, would eat too much VMEM.
    flat_min_tile_bytes = 8 * L_flat * itemsize
    use_flat = flat_min_tile_bytes * 4 <= 16 * 1024 * 1024

    if use_flat:
        L = L_flat
        reps = L // W
        # flat element e maps to weight index e % W; L % W == 0 keeps the
        # per-column weight constant for every row of the (rows, L) view.
        w_row = jnp.tile(masked_w, reps).reshape(1, L)
        rows = pl.cdiv(total, L)
        x_work = image.reshape(-1)
    else:
        L = pl.cdiv(W, 128) * 128
        pad_cols = L - W
        w_row = jnp.pad(masked_w, (0, pad_cols)).reshape(1, L)
        rows = B * C * H
        x_work = image.reshape(rows, W)
        if pad_cols:
            x_work = jnp.pad(x_work, ((0, 0), (0, pad_cols)))

    # Row tile: ~target_tile_bytes per block, multiple of 8 sublanes, never
    # (much) larger than the actual row count.
    tm = max(8, (target_tile_bytes // (L * itemsize)) // 8 * 8)
    tm = min(tm, max(8, pl.cdiv(rows, 8) * 8))
    grid = pl.cdiv(rows, tm)
    padded_rows = grid * tm

    if use_flat:
        need = padded_rows * L
        if need != total:
            x_work = jnp.pad(x_work, (0, need - total))
        x2d = x_work.reshape(padded_rows, L)
    else:
        x2d = x_work
        if padded_rows != rows:
            x2d = jnp.pad(x2d, ((0, padded_rows - rows), (0, 0)))

    out2d = _scale_rows(x2d, w_row, tm=tm, grid=grid, L=L, dtype=dtype)

    if use_flat:
        out = out2d.reshape(-1)
        if padded_rows * L != total:
            out = out[:total]
        return out.reshape(B, C, H, W)
    return out2d[:rows, :W].reshape(B, C, H, W)


# TODO(synk): the module's `prune()` method (stateful top-k pruning update) is
# training-time state mutation, not part of forward, so it is not kernelized.


if __name__ == "__main__":
    key = jax.random.PRNGKey(0)
    B, C, H, W = 2, 4, 16, 16

    k_img, k_w = jax.random.split(key)
    image = jax.random.normal(k_img, (B, C, H, W), dtype=jnp.float32)

    # Deterministic synthetic parameters (module __init__ uses ones / zeros;
    # perturb weight and prune a few entries so the test is non-trivial).
    weight = jnp.ones((W,), dtype=jnp.float32) + 0.1 * jax.random.normal(
        k_w, (W,), dtype=jnp.float32
    )
    pruned = (jnp.arange(W) % 5 == 0)  # bool buffer, deterministic pattern

    out = mask_forward(image, weight, pruned)
    out = jax.block_until_ready(out)

    # Reference check in plain JAX (same semantics as the PyTorch forward).
    masked_w = weight * jnp.where(pruned, 0.0, 1.0)
    ref = image * masked_w[None, None, None, :]
    assert out.shape == ref.shape, "shape mismatch vs reference"
    assert jnp.allclose(out, ref, atol=1e-6), "mismatch vs reference"

    print("KERNEL_OK")
</pallas_src>

<mosaic_0001>
module attributes {stable_mosaic.version = 11 : i64} {
  func.func @_mask_scale_kernel(%arg0: i32, %arg1: memref<16x128xf32, #tpu.memory_space<vmem>>, %arg2: memref<1x128xf32, #tpu.memory_space<vmem>>, %arg3: memref<16x128xf32, #tpu.memory_space<vmem>>) attributes {dimension_semantics = [#tpu.dimension_semantics<parallel>], iteration_bounds = array<i64: 1>, scalar_prefetch = 0 : i64, scratch_operands = 0 : i64, tpu.core_type = #tpu.core_type<tc>, window_params = [{transform_indices = @transform_0, window_bounds = array<i64: 16, 128>}, {pipeline_mode = #tpu.pipeline_mode<synchronous>, transform_indices = @transform_1, window_bounds = array<i64: 1, 128>}, {transform_indices = @transform_2, window_bounds = array<i64: 16, 128>}]} {
    %c0 = arith.constant 0 : index
    %c0_0 = arith.constant 0 : index
    %0 = vector.load %arg1[%c0, %c0_0] : memref<16x128xf32, #tpu.memory_space<vmem>>, vector<16x128xf32>
    %c0_1 = arith.constant 0 : index
    %c0_2 = arith.constant 0 : index
    %1 = vector.load %arg2[%c0_1, %c0_2] : memref<1x128xf32, #tpu.memory_space<vmem>>, vector<1x128xf32>
    %2 = vector.broadcast %1 : vector<1x128xf32> to vector<16x128xf32>
    %3 = arith.mulf %0, %2 : vector<16x128xf32>
    %c0_3 = arith.constant 0 : index
    %c0_4 = arith.constant 0 : index
    %4 = vector.load %arg3[%c0_3, %c0_4] : memref<16x128xf32, #tpu.memory_space<vmem>>, vector<16x128xf32>
    tpu.vector_store %arg3[%c0_3, %c0_4], %3 {strides = array<i32>} : memref<16x128xf32, #tpu.memory_space<vmem>>, vector<16x128xf32>,
    return
  }
  func.func @transform_0(%arg0: i32) -> (i32, i32) {
    %c0_i32 = arith.constant 0 : i32
    %c0_i32_0 = arith.constant 0 : i32
    return %arg0, %c0_i32 : i32, i32
  }
  func.func @transform_1(%arg0: i32) -> (i32, i32) {
    %c0_i32 = arith.constant 0 : i32
    %c0_i32_0 = arith.constant 0 : i32
    %c0_i32_1 = arith.constant 0 : i32
    return %c0_i32, %c0_i32_0 : i32, i32
  }
  func.func @transform_2(%arg0: i32) -> (i32, i32) {
    %c0_i32 = arith.constant 0 : i32
    %c0_i32_0 = arith.constant 0 : i32
    return %arg0, %c0_i32 : i32, i32
  }
}

</mosaic_0001>

<llo_original>
// kernel: tpu_custom_call.1
$region0: #{tpu_custom_call.1}
  #allocation0 [shape = 'u32[]', space=smem, size = 0x4, offset = 0x4, fixed_abs, tag = 'smem constant byte address 0x4 - core index']
  #allocation1 [shape = 'u32[72,128]{1,0:T(1,128)}', space=vmem, size = 0x9000, scoped, tag = 'internal scratch']
  %s0 = inlined_call_operand.hbm [shape: f32[16,128], index: 0, kind: input, shape index: {}]
  %s1 = inlined_call_operand.hbm [shape: f32[1,128], index: 1, kind: input, shape index: {}]
  %s2 = inlined_call_operand.hbm [shape: f32[16,128], index: 2, kind: output, shape index: {}]
  %s3 = sld [smem:[#allocation0]]
  $region26: #{tpu_custom_call.1} parent=0
    _
  %s5 = ssub.s32 1, %s3
  %s6 = scalar_select 0, %s5, %s3
  $region1: #{tpu_custom_call.1} parent=0
    #allocation2 [shape = 'u8[8192]{0}', space=vmem, size = 0x2000, scoped, tag = 'input window, operand 0, single buffered']
    #allocation3 [shape = 's32[1]{0}', space=sflag, size = 0x4, scoped, tag = 'scoped memory for tpu_custom_call.1']
    #allocation4 [shape = 's32[1]{0}', space=sflag, size = 0x4, scoped, tag = 'scoped memory for tpu_custom_call.1']
    #allocation5 [shape = 'u8[512]{0}', space=vmem, size = 0x400, scoped, tag = 'input window, operand 1, single buffered']
    #allocation6 [shape = 's32[1]{0}', space=sflag, size = 0x4, scoped, tag = 'scoped memory for tpu_custom_call.1']
    #allocation7 [shape = 'u8[8192]{0}', space=vmem, size = 0x2000, scoped, tag = 'output window, operand 0, single buffered']
    %7 = vsyncpa [#allocation3], 0
    %8 = vsyncpa [#allocation6], 0
    %9 = vsyncpa [#allocation4], 0
    // Predicated region
    $region2: #{tpu_custom_call.1} parent=1 // pred_check
      _
    $region3: #{tpu_custom_call.1} parent=1 // pred_check_branch
      %11 = sbr.rel (0) target = $region5
    $region4: #{tpu_custom_call.1} parent=1 // pred_region
      %13 = vsyncadd [#allocation3], 0
      %s14 = sshll.u32 %s0, 4
      %s15 = int_to_ptr.hbm [resolvable:$true] %s14
      %s16 = sshll.u32 [#allocation2], 4
      %s17 = int_to_ptr.vmem [resolvable:$true] %s16
      %22 = dma.hbm_to_vmem [thread:$0]  %s15, 256, %s17, [#allocation3], 128, 128, 8
    $region5: #{tpu_custom_call.1} parent=1 // pred_fallthru
      _
    // Predicated region
    $region6: #{tpu_custom_call.1} parent=1 // pred_check
      _
    $region7: #{tpu_custom_call.1} parent=1 // pred_check_branch
      %24 = sbr.rel (0) target = $region9
    $region8: #{tpu_custom_call.1} parent=1 // pred_region
      %26 = vsyncadd [#allocation6], 0
      %s28 = sshll.u32 %s1, 4
      %s29 = int_to_ptr.hbm [resolvable:$true] %s28
      %s30 = sshll.u32 [#allocation5], 4
      %s31 = int_to_ptr.vmem [resolvable:$true] %s30
      %33 = dma.hbm_to_vmem [thread:$0]  %s29, 16, %s31, [#allocation6]
    $region9: #{tpu_custom_call.1} parent=1 // pred_fallthru
      _
    // Predicated region
    $region10: #{tpu_custom_call.1} parent=1 // pred_check
      _
    $region11: #{tpu_custom_call.1} parent=1 // pred_check_branch
      %35 = sbr.rel (0) target = $region13
    $region12: #{tpu_custom_call.1} parent=1 // pred_region
      %37 = dma.done [#allocation3], 256
    $region13: #{tpu_custom_call.1} parent=1 // pred_fallthru
      _
    // Predicated region
    $region14: #{tpu_custom_call.1} parent=1 // pred_check
      _
    $region15: #{tpu_custom_call.1} parent=1 // pred_check_branch
      %39 = sbr.rel (0) target = $region17
    $region16: #{tpu_custom_call.1} parent=1 // pred_region
      %41 = dma.done [#allocation6], 16
    $region17: #{tpu_custom_call.1} parent=1 // pred_fallthru
      _
    %v42 = vld [vmem:[#allocation2] sm:$0xff]
    %v43 = vld [vmem:[#allocation2 + $0x8] sm:$0xff]
    %v44 = vld [vmem:[#allocation5] sm:$0x1]
    %v46 = vperm.slane %v44, 0
    %v48 = vmul.f32 %v42, %v46
    %v49 = vmul.f32 %v43, %v46
    %50 = vst [vmem:[#allocation7] sm:$0xff] %v48
    %51 = vst [vmem:[#allocation7 + $0x8] sm:$0xff] %v49
    // Predicated region
    $region18: #{tpu_custom_call.1} parent=1 // pred_check
      _
    $region19: #{tpu_custom_call.1} parent=1 // pred_check_branch
      %53 = sbr.rel (0) target = $region21
    $region20: #{tpu_custom_call.1} parent=1 // pred_region
      %55 = vsyncadd [#allocation4], 0
      %s56 = sshll.u32 [#allocation7], 4
      %s57 = int_to_ptr.vmem [resolvable:$true] %s56
      %s58 = sshll.u32 %s2, 4
      %s59 = int_to_ptr.hbm [resolvable:$true] %s58
      %64 = dma.vmem_to_hbm [thread:$0]  %s57, 256, %s59, [#allocation4], 128, 128, 8
    $region21: #{tpu_custom_call.1} parent=1 // pred_fallthru
      _
    // Predicated region
    $region22: #{tpu_custom_call.1} parent=1 // pred_check
      _
    $region23: #{tpu_custom_call.1} parent=1 // pred_check_branch
      %66 = sbr.rel (0) target = $region25
    $region24: #{tpu_custom_call.1} parent=1 // pred_region
      %68 = dma.done [#allocation4], 256
    $region25: #{tpu_custom_call.1} parent=1 // pred_fallthru
      _
    %69 = vsyncpa [#allocation3], 1
    %70 = vsyncpa [#allocation6], 1
    %71 = vsyncpa [#allocation4], 1

</llo_original>
